<compile_context>
chip_gen: v7x
topology: tpu7x:2x2x1
jax: 0.10.0
libtpu: 0.0.40
codegen_flags: <defaults>
</compile_context>

<pallas_src>
import jax
import jax.numpy as jnp
from jax.experimental import pallas as pl
from jax.experimental.pallas import tpu as pltpu


# --- Tile policy constants ---------------------------------------------------
# Per-step working set (input tile + output tile). 1-4 MiB is the measured sweet
# spot for a mem-bound copy (~85% of HBM roofline); bigger tiles only collapse the
# grid to 1-2 steps and kill software pipelining.
_TARGET_TILE_BYTES = 2 * 1024 * 1024
# Keep the pipeline busy and give v7x's two TensorCores blocks to shard.
_MIN_GRID_STEPS = 8
# Scoped-VMEM request: <= 32 MiB is valid on every generation (v7x: 64 MiB physical,
# 32 MiB scoped default). With 1-4 MiB tiles + Buffered(3) we use well under it.
_VMEM_LIMIT_BYTES = 32 * 1024 * 1024
# Below this output size a plain XLA slice (which fuses into neighbours) wins.
_SMALL_PROBLEM_BYTES = 4 * 1024 * 1024
# Input-side buffer depth once the grid has enough steps (pure-DMA kernel:
# the extra buffer hides DMA-issue latency/jitter and is ~free in VMEM).
_BUFFER_DEPTH = 3


def _sublane_multiple(dtype) -> int:
    itemsize = jnp.dtype(dtype).itemsize
    return {4: 8, 2: 16, 1: 32}.get(itemsize, 8)


def _round_up(x: int, m: int) -> int:
    return ((x + m - 1) // m) * m


def _round_down(x: int, m: int) -> int:
    return (x // m) * m


def _pick_l_block(l_out: int, itemsize: int, sub: int) -> int:
    """Lane-dense (multiple-of-128) column block.

    Prefer the full output width (rounded up to 128) so HBM reads stay
    L_out-contiguous and there is no column grid dim; only block columns when a
    single sublane-group of full-width rows would bust the per-step budget.
    """
    full = _round_up(l_out, 128)
    if 2 * full * itemsize * sub <= _TARGET_TILE_BYTES:
        return full
    max_l = _TARGET_TILE_BYTES // (2 * itemsize * sub)
    return max(128, _round_down(max_l, 128))


def _pick_row_tile(rows: int, sub: int, l_blk: int, itemsize: int,
                   col_blocks: int) -> int:
    """Row tile: multiple of the sublane packing, capped both by the per-step VMEM
    budget and by a 'keep the grid >= _MIN_GRID_STEPS steps, >= 2 row blocks' target
    so pipelining (and v7x per-core sharding) always has work."""
    if rows <= sub:
        return rows                                    # full dim — always legal
    max_r_budget = max(
        sub, _round_down(_TARGET_TILE_BYTES // (2 * l_blk * itemsize), sub))
    desired_row_blocks = max(2, -(-_MIN_GRID_STEPS // col_blocks))   # ceil div
    max_r_steps = max(sub, _round_down(rows // desired_row_blocks, sub))
    return max(sub, min(max_r_budget, max_r_steps))


def _copy_kernel(x_ref, o_ref):
    # Pure copy: the chomp is expressed entirely in out_shape / BlockSpec edge
    # masking; the body never touches the chomped tail.
    o_ref[...] = x_ref[...]


def _slice_copy_kernel(x_ref, o_ref):
    # Tiny-L_out fallback: full-dim blocks (always layout-legal) + static slice.
    o_ref[...] = x_ref[:, : o_ref.shape[-1]]


def _chomp1d_pallas(x, chomp_size: int):
    N, C, L = x.shape
    L_out = L - chomp_size
    dtype = x.dtype
    itemsize = jnp.dtype(dtype).itemsize
    R = N * C
    x2d = x.reshape(R, L)                               # contiguous reshape: free
    sub = _sublane_multiple(dtype)

    if L_out >= 128:
        # Lane-dense blocked copy. Column blocks are multiples of 128; only the
        # final column block (if L_out is not a multiple of l_blk) gets masked
        # edge stores, and the input read past L_out/L there is padded by Pallas
        # and never stored. When L_out is a multiple of 128 and fits the budget
        # there is exactly one column block and nothing is masked or read from
        # the chomped tail at all.
        l_blk = _pick_l_block(L_out, itemsize, sub)
        col_blocks = pl.cdiv(L_out, l_blk)
        tile_r = _pick_row_tile(R, sub, l_blk, itemsize, col_blocks)
        row_blocks = pl.cdiv(R, tile_r)
        total_steps = row_blocks * col_blocks

        in_kwargs = {}
        if total_steps >= _BUFFER_DEPTH + 1:
            in_kwargs["pipeline_mode"] = pl.Buffered(_BUFFER_DEPTH)

        grid = (row_blocks, col_blocks)
        in_specs = [pl.BlockSpec((tile_r, l_blk), lambda i, j: (i, j), **in_kwargs)]
        out_specs = pl.BlockSpec((tile_r, l_blk), lambda i, j: (i, j))
        kernel = _copy_kernel
        dim_sem = ("parallel", "parallel")
    else:
        # L_out < 128: a lane-dense store is impossible; use full-dim blocks and a
        # static in-kernel slice. Problems this small should normally take the
        # plain-JAX slice via auto-dispatch anyway.
        per_row_bytes = (L + L_out) * itemsize
        max_r = max(sub, _round_down(_TARGET_TILE_BYTES // max(per_row_bytes, 1), sub))
        tile_r = R if R <= sub else min(max_r, _round_down(R, sub))
        grid = (pl.cdiv(R, tile_r),)
        in_specs = [pl.BlockSpec((tile_r, L), lambda i: (i, 0))]
        out_specs = pl.BlockSpec((tile_r, L_out), lambda i: (i, 0))
        kernel = _slice_copy_kernel
        dim_sem = ("parallel",)

    out2d = pl.pallas_call(
        kernel,
        out_shape=jax.ShapeDtypeStruct((R, L_out), dtype),
        grid_spec=pltpu.PrefetchScalarGridSpec(
            num_scalar_prefetch=0,
            grid=grid,
            in_specs=in_specs,
            out_specs=out_specs,
        ),
        compiler_params=pltpu.CompilerParams(
            dimension_semantics=dim_sem,
            vmem_limit_bytes=_VMEM_LIMIT_BYTES,
        ),
    )(x2d)
    return out2d.reshape(N, C, L_out)


def chomp1d(x, chomp_size: int, *, use_pallas=None):
    """Pallas implementation of Chomp1d.forward: x[:, :, :L - chomp_size].

    Args:
      x: jnp.ndarray of shape (N, C, L).
      chomp_size: number of trailing timesteps to drop.
      use_pallas: True forces the Pallas kernel, False forces a plain slice,
        None (default) auto-dispatches (Pallas only for large, lane-dense problems).
    """
    if chomp_size == 0:
        return x
    N, C, L = x.shape
    L_out = L - chomp_size
    assert L_out > 0, "chomp_size must be smaller than the sequence length"

    if use_pallas is None:
        # A materialized chomp always pays a full HBM read+write of the output; for
        # anything that is not clearly large and lane-dense, let XLA fuse the slice.
        # TODO(synk): best case is folding the chomp into the consumer kernel's
        # (the TCN conv's) index_map so no standalone copy is materialized at all.
        out_bytes = N * C * L_out * jnp.dtype(x.dtype).itemsize
        use_pallas = (L_out >= 128) and (out_bytes >= _SMALL_PROBLEM_BYTES)

    if not use_pallas:
        return x[:, :, :L_out]
    return _chomp1d_pallas(x, chomp_size)


if __name__ == "__main__":
    key = jax.random.PRNGKey(0)
    k1, k2, k3, k4 = jax.random.split(key, 4)

    # 1) Spec-like small shape (N=2, C=4, L=16), chomp=3 — forced Pallas path;
    #    L_out=13 < 128 exercises the full-dim slice fallback.
    N, C, L, chomp = 2, 4, 16, 3
    x = jax.random.normal(k1, (N, C, L), dtype=jnp.float32)
    y = jax.block_until_ready(chomp1d(x, chomp, use_pallas=True))
    assert y.shape == (N, C, L - chomp), y.shape
    assert jnp.array_equal(y, x[:, :, :L - chomp]), "ragged-small mismatch"

    # 2) Lane-aligned L_out = 384 (3*128), bf16 — single lane-dense block; the
    #    chomped tail is never read or stored.
    x2 = jax.random.normal(k2, (2, 8, 400), dtype=jnp.bfloat16)
    y2 = jax.block_until_ready(chomp1d(x2, 16, use_pallas=True))
    assert y2.shape == (2, 8, 384), y2.shape
    assert jnp.array_equal(y2, x2[:, :, :384]), "lane-aligned mismatch"

    # 3) Multi-step grid (R=128, L_out=1024): 8 row blocks -> real pipelining,
    #    Buffered(3) input, >= 2 parallel row blocks for v7x core sharding.
    x3 = jax.random.normal(k3, (4, 32, 1040), dtype=jnp.float32)
    y3 = jax.block_until_ready(chomp1d(x3, 16, use_pallas=True))
    assert y3.shape == (4, 32, 1024), y3.shape
    assert jnp.array_equal(y3, x3[:, :, :1024]), "multi-step mismatch"

    # 4) Misaligned L_out = 297 (>= 128): lane-dense blocks with only the final
    #    column block edge-masked by Pallas.
    x4 = jax.random.normal(k4, (2, 16, 300), dtype=jnp.float32)
    y4 = jax.block_until_ready(chomp1d(x4, 3, use_pallas=True))
    assert y4.shape == (2, 16, 297), y4.shape
    assert jnp.array_equal(y4, x4[:, :, :297]), "misaligned mismatch"

    # 5) chomp_size == 0 returns the input unchanged.
    assert jnp.array_equal(jax.block_until_ready(chomp1d(x, 0)), x)

    # 6) Auto dispatch: tiny problems skip the kernel and use the fusible slice.
    y_auto = jax.block_until_ready(chomp1d(x, chomp))
    assert jnp.array_equal(y_auto, x[:, :, :L - chomp])

    print("KERNEL_OK")
</pallas_src>

<mosaic_0001>
module attributes {stable_mosaic.version = 11 : i64} {
  func.func @_slice_copy_kernel(%arg0: i32, %arg1: memref<8x16xf32, #tpu.memory_space<vmem>>, %arg2: memref<8x13xf32, #tpu.memory_space<vmem>>) attributes {dimension_semantics = [#tpu.dimension_semantics<parallel>], iteration_bounds = array<i64: 1>, scalar_prefetch = 0 : i64, scratch_operands = 0 : i64, tpu.core_type = #tpu.core_type<tc>, window_params = [{transform_indices = @transform_0, window_bounds = array<i64: 8, 16>}, {transform_indices = @transform_1, window_bounds = array<i64: 8, 13>}]} {
    %c0 = arith.constant 0 : index
    %c0_0 = arith.constant 0 : index
    %0 = vector.load %arg1[%c0, %c0_0] : memref<8x16xf32, #tpu.memory_space<vmem>>, vector<8x13xf32>
    %c0_1 = arith.constant 0 : index
    %c0_2 = arith.constant 0 : index
    %1 = vector.load %arg2[%c0_1, %c0_2] : memref<8x13xf32, #tpu.memory_space<vmem>>, vector<8x13xf32>
    tpu.vector_store %arg2[%c0_1, %c0_2], %0 {strides = array<i32>} : memref<8x13xf32, #tpu.memory_space<vmem>>, vector<8x13xf32>,
    return
  }
  func.func @transform_0(%arg0: i32) -> (i32, i32) {
    %c0_i32 = arith.constant 0 : i32
    %c0_i32_0 = arith.constant 0 : i32
    return %arg0, %c0_i32 : i32, i32
  }
  func.func @transform_1(%arg0: i32) -> (i32, i32) {
    %c0_i32 = arith.constant 0 : i32
    %c0_i32_0 = arith.constant 0 : i32
    return %arg0, %c0_i32 : i32, i32
  }
}

</mosaic_0001>

<llo_original>
// kernel: tpu_custom_call.1
$region0: #{tpu_custom_call.1}
  #allocation0 [shape = 'u32[]', space=smem, size = 0x4, offset = 0x4, fixed_abs, tag = 'smem constant byte address 0x4 - core index']
  #allocation1 [shape = 'u32[144,128]{1,0:T(1,128)}', space=vmem, size = 0x12000, scoped, tag = 'internal scratch']
  %s0 = inlined_call_operand.hbm [shape: f32[8,16], index: 0, kind: input, shape index: {}]
  %s1 = inlined_call_operand.hbm [shape: f32[8,13], index: 1, kind: output, shape index: {}]
  %s2 = sld [smem:[#allocation0]]
  $region18: #{tpu_custom_call.1} parent=0
    _
  %s4 = ssub.s32 1, %s2
  %s5 = scalar_select 0, %s4, %s2
  $region1: #{tpu_custom_call.1} parent=0
    #allocation2 [shape = 'u8[4096]{0}', space=vmem, size = 0x1000, scoped, tag = 'input window, operand 0, single buffered']
    #allocation3 [shape = 's32[1]{0}', space=sflag, size = 0x4, scoped, tag = 'scoped memory for tpu_custom_call.1']
    #allocation4 [shape = 's32[1]{0}', space=sflag, size = 0x4, scoped, tag = 'scoped memory for tpu_custom_call.1']
    #allocation5 [shape = 'u8[4096]{0}', space=vmem, size = 0x1000, scoped, tag = 'output window, operand 0, single buffered']
    %6 = vsyncpa [#allocation3], 0
    %7 = vsyncpa [#allocation4], 0
    // Predicated region
    $region2: #{tpu_custom_call.1} parent=1 // pred_check
      _
    $region3: #{tpu_custom_call.1} parent=1 // pred_check_branch
      %9 = sbr.rel (0) target = $region5
    $region4: #{tpu_custom_call.1} parent=1 // pred_region
      %s11 = ssub.s32 128, 128
      %12 = vsyncadd [#allocation3], %s11
      %s14 = sshll.u32 [#allocation2], 4
      %s15 = int_to_ptr.vmem [resolvable:$true] %s14
      %17 = dma.hbm_to_vmem [thread:$0]  %s0, 128, %s15, [#allocation3]
    $region5: #{tpu_custom_call.1} parent=1 // pred_fallthru
      _
    // Predicated region
    $region6: #{tpu_custom_call.1} parent=1 // pred_check
      _
    $region7: #{tpu_custom_call.1} parent=1 // pred_check_branch
      %19 = sbr.rel (0) target = $region9
    $region8: #{tpu_custom_call.1} parent=1 // pred_region
      %20 = dma.done [#allocation3], 128
    $region9: #{tpu_custom_call.1} parent=1 // pred_fallthru
      _
    %v21 = vld [vmem:[#allocation2] sm:$0xff]
    %vm22 = vcmask 105472
    %23 = vst.msk [vmem:[#allocation5] sm:$0xff] %vm22, %v21
    // Predicated region
    $region10: #{tpu_custom_call.1} parent=1 // pred_check
      _
    $region11: #{tpu_custom_call.1} parent=1 // pred_check_branch
      %25 = sbr.rel (0) target = $region13
    $region12: #{tpu_custom_call.1} parent=1 // pred_region
      %s27 = ssub.s32 128, 128
      %28 = vsyncadd [#allocation4], %s27
      %s30 = sshll.u32 [#allocation5], 4
      %s31 = int_to_ptr.vmem [resolvable:$true] %s30
      %33 = dma.vmem_to_hbm [thread:$0]  %s31, 128, %s1, [#allocation4]
    $region13: #{tpu_custom_call.1} parent=1 // pred_fallthru
      _
    // Predicated region
    $region14: #{tpu_custom_call.1} parent=1 // pred_check
      _
    $region15: #{tpu_custom_call.1} parent=1 // pred_check_branch
      %35 = sbr.rel (0) target = $region17
    $region16: #{tpu_custom_call.1} parent=1 // pred_region
      %36 = dma.done [#allocation4], 128
    $region17: #{tpu_custom_call.1} parent=1 // pred_fallthru
      _
    %37 = vsyncpa [#allocation3], 1
    %38 = vsyncpa [#allocation4], 1

</llo_original>
